<compile_context>
chip_gen: v6e
topology: v6e:2x2x1
jax: 0.10.0
libtpu: 0.0.40
codegen_flags: <defaults>
</compile_context>

<pallas_src>
import numpy as np

import jax
import jax.numpy as jnp
from jax.experimental import pallas as pl
from jax.experimental.pallas import tpu as pltpu


def _rup(a: int, m: int) -> int:
    return ((a + m - 1) // m) * m


def _make_kernel(*, tk, ck, msteps, in_features, need_col_mask, precision):
    def kernel(ktab_ref, nvalid_ref, idx_ref, x_ref, o_ref):
        # ktab_ref:   (nj*msteps,) int32 SMEM — K block id per (j, l) step
        # nvalid_ref: (nj,)        int32 SMEM — number of valid K steps per j
        # idx_ref:    (1, TN)      int32 VMEM — global column ids (padded = -1)
        # x_ref:      (TB, TK)          VMEM — input tile
        # o_ref:      (TB, TN)          VMEM — output tile (resident across l)
        j = pl.program_id(1)
        l = pl.program_id(2)

        @pl.when(l == 0)
        def _init():
            o_ref[...] = jnp.zeros_like(o_ref)

        @pl.when(l < nvalid_ref[j])
        def _step():
            kblk = ktab_ref[j * msteps + l]        # global K block for this step
            base = kblk * tk
            idx = idx_ref[...]                     # (1, TN) int32
            tn = idx.shape[1]
            # Build the one-hot in small K sub-chunks so its VMEM temp stays
            # bounded even when TN is large.
            for c0 in range(0, tk, ck):
                xc = x_ref[:, c0:c0 + ck]          # (TB, CK)
                if need_col_mask:
                    # Ragged last K tile: zero columns >= in_features so
                    # undefined OOB data never reaches the MXU (0*NaN = NaN).
                    col = jax.lax.broadcasted_iota(jnp.int32, xc.shape, 1) + (base + c0)
                    xc = jnp.where(col < in_features, xc, jnp.zeros_like(xc))
                rows = jax.lax.broadcasted_iota(jnp.int32, (ck, tn), 0)
                onehot = (rows == (idx - (base + c0))).astype(xc.dtype)   # (CK, TN)
                o_ref[...] += jnp.dot(
                    xc, onehot,
                    precision=precision,
                    preferred_element_type=jnp.float32,
                ).astype(o_ref.dtype)

    return kernel


def digital_mapper_eval_only_v2(x: jax.Array, indexes: jax.Array, *,
                                tb_max: int = 256, tk_max: int = 512,
                                tn_max: int = 8192,
                                vmem_budget_bytes: int = 24 * 1024 * 1024) -> jax.Array:
    """Pallas TPU equivalent of DigitalMapper_eval_only_v2.forward: x[:, indexes]."""
    if x.ndim != 2:
        raise ValueError("input must be rank-2 (batch, in_features)")
    if indexes.ndim != 1:
        raise ValueError("Param:indexes must be a rank-1 tensor.")
    batch, in_features = x.shape
    out_features = int(indexes.shape[0])
    if out_features == 0:
        return jnp.zeros((batch, 0), x.dtype)

    in_bytes = x.dtype.itemsize
    out_bytes = in_bytes
    sublane = max(8, 32 // in_bytes)          # 8 for f32, 16 for bf16, 32 for int8/fp8

    # ---------------- tile selection ----------------
    tk = min(tk_max, _rup(in_features, 128))  # DMA tile over in_features (mult. of 128)
    tb = min(tb_max, _rup(batch, sublane))    # batch tile
    ck = 128                                  # in-kernel one-hot chunk rows

    # Output-feature tile: as wide as the VMEM budget allows so the gather is a
    # single pass over x whenever possible.  Budget is conservative enough for
    # v7x's smaller VMEM; v5e/v6e have extra headroom.
    per_col = 2 * tb * out_bytes + ck * in_bytes + ck * 4 + 8 + 64
    avail = vmem_budget_bytes - 2 * tb * tk * in_bytes - (1 << 20)
    tn_fit = max(128, (avail // per_col) // 128 * 128)
    tn = min(_rup(out_features, 128), tn_fit, tn_max)

    # Multi-TensorCore chips: guarantee >= 2 blocks along a parallel axis when
    # possible.  Batch split is traffic-free; out-feature split re-reads x once.
    try:
        kind = jax.devices()[0].device_kind.lower()
    except Exception:
        kind = ""
    multi_tc = any(t in kind for t in ("v3", "v4", "v7"))
    if multi_tc and pl.cdiv(batch, tb) * pl.cdiv(out_features, tn) < 2:
        tb_half = max(sublane, _rup(-(-batch // 2), sublane))
        tn_half = max(128, _rup(-(-out_features // 2), 128))
        if batch > tb_half:
            tb = tb_half
        elif out_features > tn_half:
            tn = tn_half

    ni = pl.cdiv(batch, tb)
    nj = pl.cdiv(out_features, tn)
    pn = nj * tn
    nk_total = pl.cdiv(in_features, tk)

    # Index row, padded with -1 so padded output columns gather nothing.
    idx_row = jnp.full((1, pn), -1, jnp.int32)
    idx_row = idx_row.at[0, :out_features].set(indexes.astype(jnp.int32))

    # ---------------- per-output-tile K schedule (dead-K-tile skip) ----------------
    # `indexes` is a fixed parameter, normally concrete here.  If it is traced
    # (wrapper jit-ed over indexes) fall back to a dense K walk.
    try:
        idx_host = np.asarray(jax.device_get(indexes)).astype(np.int64).reshape(-1)
    except Exception:
        idx_host = None

    if idx_host is not None:
        if idx_host.size and (idx_host.min() < 0 or idx_host.max() >= in_features):
            raise ValueError("it's definitely gonna have out of range bug.")
        rows, counts = [], []
        for j in range(nj):
            sub = idx_host[j * tn:(j + 1) * tn]
            blocks = sorted({int(v) // tk for v in sub}) or [0]
            rows.append(blocks)
            counts.append(len(blocks))
        msteps = max(counts)
        # Dead tail steps repeat the last valid block: the pipeline elides the
        # redundant copy and the kernel skips the compute via nvalid.
        ktab_host = np.array(
            [r + [r[-1]] * (msteps - len(r)) for r in rows], np.int32).reshape(-1)
        nvalid_host = np.array(counts, np.int32)
    else:
        msteps = nk_total
        ktab_host = np.tile(np.arange(nk_total, dtype=np.int32), nj)
        nvalid_host = np.full((nj,), nk_total, np.int32)

    ktab = jnp.asarray(ktab_host)
    nvalid = jnp.asarray(nvalid_host)

    # ---------------- kernel & call ----------------
    need_col_mask = (in_features % tk) != 0
    precision = jax.lax.Precision.HIGHEST if x.dtype == jnp.float32 else None
    kernel = _make_kernel(tk=tk, ck=ck, msteps=msteps, in_features=in_features,
                          need_col_mask=need_col_mask, precision=precision)

    steps = int(nvalid_host.sum()) * ni
    cost = pl.CostEstimate(
        flops=2 * tb * tk * tn * steps,
        transcendentals=0,
        bytes_accessed=tb * tk * in_bytes * steps
        + batch * in_features * in_bytes
        + batch * out_features * out_bytes,
    )

    out = pl.pallas_call(
        kernel,
        out_shape=jax.ShapeDtypeStruct((batch, out_features), x.dtype),
        grid_spec=pltpu.PrefetchScalarGridSpec(
            num_scalar_prefetch=2,
            grid=(ni, nj, msteps),
            in_specs=[
                # index row: depends only on the output-feature tile j
                pl.BlockSpec((1, tn), lambda i, j, l, kt, nv: (0, j)),
                # x tile: (batch tile i, K block looked up in the SMEM schedule)
                pl.BlockSpec((tb, tk),
                             lambda i, j, l, kt, nv: (i, kt[j * msteps + l])),
            ],
            out_specs=pl.BlockSpec((tb, tn), lambda i, j, l, kt, nv: (i, j)),
        ),
        compiler_params=pltpu.CompilerParams(
            dimension_semantics=("parallel", "parallel", "arbitrary"),
        ),
        cost_estimate=cost,
    )(ktab, nvalid, idx_row, x)

    return out


if __name__ == "__main__":
    # Shapes implied by the module definition: in_features = 30, small batch.
    in_features = 30
    out_features = 8
    batch = 2

    key = jax.random.PRNGKey(0)
    k_x, k_idx = jax.random.split(key)
    indexes = jax.random.randint(
        k_idx, shape=(out_features,), minval=0, maxval=in_features, dtype=jnp.int32)
    x = jax.random.normal(k_x, (batch, in_features), dtype=jnp.float32)

    out = jax.block_until_ready(digital_mapper_eval_only_v2(x, indexes))
    ref = x[:, indexes]
    assert out.shape == ref.shape
    assert jnp.array_equal(out, ref), "mismatch vs reference gather (small case)"

    # Second case: multiple K blocks, dead-K-tile skip, ragged-tile masking.
    k_x2, k_idx2 = jax.random.split(jax.random.PRNGKey(1))
    b2, fi2, fo2 = 10, 700, 200
    idx2 = jax.random.randint(k_idx2, (fo2,), 0, fi2, dtype=jnp.int32)
    x2 = jax.random.normal(k_x2, (b2, fi2), dtype=jnp.float32)
    out2 = jax.block_until_ready(digital_mapper_eval_only_v2(x2, idx2))
    assert jnp.array_equal(out2, x2[:, idx2]), "mismatch vs reference gather (large case)"

    print("KERNEL_OK")
</pallas_src>

<mosaic_0001>
module attributes {stable_mosaic.version = 11 : i64} {
  func.func @kernel(%arg0: i32, %arg1: i32, %arg2: i32, %arg3: memref<1xi32, #tpu.memory_space<smem>>, %arg4: memref<1xi32, #tpu.memory_space<smem>>, %arg5: memref<1x128xi32, #tpu.memory_space<vmem>>, %arg6: memref<8x128xf32, #tpu.memory_space<vmem>>, %arg7: memref<8x128xf32, #tpu.memory_space<vmem>>) attributes {dimension_semantics = [#tpu.dimension_semantics<parallel>, #tpu.dimension_semantics<parallel>, #tpu.dimension_semantics<arbitrary>], iteration_bounds = array<i64: 1, 1, 1>, scalar_prefetch = 2 : i64, scratch_operands = 0 : i64, tpu.core_type = #tpu.core_type<tc>, window_params = [{transform_indices = @transform_0, window_bounds = array<i64: 1, 128>}, {transform_indices = @transform_1, window_bounds = array<i64: 8, 128>}, {transform_indices = @transform_2, window_bounds = array<i64: 8, 128>}]} {
    %c0_i32 = arith.constant 0 : i32
    %0 = arith.cmpi eq, %arg2, %c0_i32 : i32
    %1 = arith.extui %0 : i1 to i32
    %c0_i32_0 = arith.constant 0 : i32
    %2 = arith.cmpi ne, %1, %c0_i32_0 : i32
    scf.if %2 {
      %cst = arith.constant 0.000000e+00 : f32
      %8 = vector.broadcast %cst : f32 to vector<8x128xf32>
      %c0 = arith.constant 0 : index
      %c0_2 = arith.constant 0 : index
      %9 = vector.load %arg7[%c0, %c0_2] : memref<8x128xf32, #tpu.memory_space<vmem>>, vector<8x128xf32>
      tpu.vector_store %arg7[%c0, %c0_2], %8 {strides = array<i32>} : memref<8x128xf32, #tpu.memory_space<vmem>>, vector<8x128xf32>,
    } else {
    }
    %3 = arith.index_cast %arg1 : i32 to index
    %4 = memref.load %arg4[%3] : memref<1xi32, #tpu.memory_space<smem>>
    %5 = arith.cmpi slt, %arg2, %4 : i32
    %6 = arith.extui %5 : i1 to i32
    %c0_i32_1 = arith.constant 0 : i32
    %7 = arith.cmpi ne, %6, %c0_i32_1 : i32
    scf.if %7 {
      %c1_i32 = arith.constant 1 : i32
      %8 = arith.muli %arg1, %c1_i32 : i32
      %9 = arith.addi %8, %arg2 : i32
      %10 = arith.index_cast %9 : i32 to index
      %11 = memref.load %arg3[%10] : memref<1xi32, #tpu.memory_space<smem>>
      %c128_i32 = arith.constant 128 : i32
      %12 = arith.muli %11, %c128_i32 : i32
      %c0 = arith.constant 0 : index
      %c0_2 = arith.constant 0 : index
      %13 = vector.load %arg5[%c0, %c0_2] : memref<1x128xi32, #tpu.memory_space<vmem>>, vector<1x128xi32>
      %c0_3 = arith.constant 0 : index
      %c0_4 = arith.constant 0 : index
      %14 = vector.load %arg6[%c0_3, %c0_4] : memref<8x128xf32, #tpu.memory_space<vmem>>, vector<8x128xf32>
      %15 = tpu.iota {dimensions = array<i32: 1>} : vector<8x128xi32>
      %c0_i32_5 = arith.constant 0 : i32
      %16 = arith.addi %12, %c0_i32_5 : i32
      %17 = vector.broadcast %16 : i32 to vector<8x128xi32>
      %18 = arith.addi %15, %17 : vector<8x128xi32>
      %c30_i32 = arith.constant 30 : i32
      %19 = vector.broadcast %c30_i32 : i32 to vector<8x128xi32>
      %20 = arith.cmpi slt, %18, %19 : vector<8x128xi32>
      %cst = arith.constant 0.000000e+00 : f32
      %21 = vector.broadcast %cst : f32 to vector<8x128xf32>
      %22 = arith.select %20, %14, %21 : vector<8x128xi1>, vector<8x128xf32>
      %23 = tpu.iota {dimensions = array<i32: 0>} : vector<128x128xi32>
      %c0_i32_6 = arith.constant 0 : i32
      %24 = arith.addi %12, %c0_i32_6 : i32
      %25 = vector.broadcast %24 : i32 to vector<1x128xi32>
      %26 = arith.subi %13, %25 : vector<1x128xi32>
      %27 = vector.broadcast %26 : vector<1x128xi32> to vector<128x128xi32>
      %28 = arith.cmpi eq, %23, %27 : vector<128x128xi32>
      %29 = arith.extui %28 : vector<128x128xi1> to vector<128x128xi32>
      %30 = arith.sitofp %29 : vector<128x128xi32> to vector<128x128xf32>
      %c0_7 = arith.constant 0 : index
      %c0_8 = arith.constant 0 : index
      %31 = vector.load %arg7[%c0_7, %c0_8] : memref<8x128xf32, #tpu.memory_space<vmem>>, vector<8x128xf32>
      %cst_9 = arith.constant dense<0.000000e+00> : vector<8x128xf32>
      %32 = tpu.matmul %22, %30, %cst_9 {dimension_numbers = #tpu.dot_dimension_numbers<[1], [0], [0], [1], [0, 0, 1, 1], [], []>, precision = #tpu.contract_precision<fp32>} : vector<8x128xf32>, vector<128x128xf32>, vector<8x128xf32> -> vector<8x128xf32>
      %33 = arith.addf %31, %32 : vector<8x128xf32>
      %c0_10 = arith.constant 0 : index
      %c0_11 = arith.constant 0 : index
      %34 = vector.load %arg7[%c0_10, %c0_11] : memref<8x128xf32, #tpu.memory_space<vmem>>, vector<8x128xf32>
      tpu.vector_store %arg7[%c0_10, %c0_11], %33 {strides = array<i32>} : memref<8x128xf32, #tpu.memory_space<vmem>>, vector<8x128xf32>,
    } else {
    }
    return
  }
  func.func @transform_0(%arg0: i32, %arg1: i32, %arg2: i32, %arg3: memref<1xi32, #tpu.memory_space<smem>>, %arg4: memref<1xi32, #tpu.memory_space<smem>>) -> (i32, i32) {
    %c0_i32 = arith.constant 0 : i32
    %c0_i32_0 = arith.constant 0 : i32
    return %c0_i32, %arg1 : i32, i32
  }
  func.func @transform_1(%arg0: i32, %arg1: i32, %arg2: i32, %arg3: memref<1xi32, #tpu.memory_space<smem>>, %arg4: memref<1xi32, #tpu.memory_space<smem>>) -> (i32, i32) {
    %c1_i32 = arith.constant 1 : i32
    %0 = arith.muli %arg1, %c1_i32 : i32
    %1 = arith.addi %0, %arg2 : i32
    %2 = arith.index_cast %1 : i32 to index
    %3 = memref.load %arg3[%2] : memref<1xi32, #tpu.memory_space<smem>>
    %c0_i32 = arith.constant 0 : i32
    return %arg0, %3 : i32, i32
  }
  func.func @transform_2(%arg0: i32, %arg1: i32, %arg2: i32, %arg3: memref<1xi32, #tpu.memory_space<smem>>, %arg4: memref<1xi32, #tpu.memory_space<smem>>) -> (i32, i32) {
    %c0_i32 = arith.constant 0 : i32
    return %arg0, %arg1 : i32, i32
  }
}

</mosaic_0001>

<llo_original>
// kernel: tpu_custom_call.1
$region0: #{tpu_custom_call.1}
  #allocation0 [shape = 'u32[]', space=smem, size = 0x4, offset = 0x4, fixed_abs, tag = 'smem constant byte address 0x4 - core index']
  #allocation1 [shape = 'u32[144,128]{1,0:T(1,128)}', space=vmem, size = 0x12000, scoped, tag = 'internal scratch']
  #allocation2 [shape = 's32[1]{0}', space=sflag, size = 0x4, scoped, tag = 'scoped memory for tpu_custom_call.1']
  #allocation3 [shape = 's32[1]{0:T(128)S(6)}', space=smem, size = 0x200, scoped, tag = 'prefetched SMEM operand 0']
  #allocation4 [shape = 's32[1]{0:T(128)S(6)}', space=smem, size = 0x200, scoped, tag = 'prefetched SMEM operand 1']
  %s0 = inlined_call_operand.<no memory space> [shape: s32[1], index: 0, kind: input, shape index: {}]
  %s1 = inlined_call_operand.<no memory space> [shape: s32[1], index: 1, kind: input, shape index: {}]
  %s2 = inlined_call_operand.vmem [shape: s32[1,128], index: 2, kind: input, shape index: {}]
  %s3 = inlined_call_operand.vmem [shape: f32[2,30], index: 3, kind: input, shape index: {}]
  %s4 = inlined_call_operand.hbm [shape: f32[2,8], index: 4, kind: output, shape index: {}]
  %s5 = sld [smem:[#allocation0]]
  $region26: #{tpu_custom_call.1} parent=0
    _
  %s7 = ssub.s32 1, %s5
  %s8 = scalar_select 0, %s7, %s5
  %9 = sst [smem:[#allocation3]] %s0
  %10 = sst [smem:[#allocation4]] %s1
  $region1: #{tpu_custom_call.1} parent=0
    #allocation5 [shape = 'u8[4096]{0}', space=vmem, size = 0x1000, scoped, tag = 'output window, operand 0, single buffered']
    #allocation6 [shape = 's32[1]{0}', space=sflag, size = 0x4, scoped, tag = 'scoped memory for tpu_custom_call.1']
    %11 = vsyncpa [#allocation6], 0
    // Predicated region
    $region2: #{tpu_custom_call.1} parent=1 // pred_check
      _
    $region3: #{tpu_custom_call.1} parent=1 // pred_check_branch
      %13 = sbr.rel (0) target = $region5
    $region4: #{tpu_custom_call.1} parent=1 // pred_region
      _
    $region5: #{tpu_custom_call.1} parent=1 // pred_fallthru
      _
    // Predicated region
    $region6: #{tpu_custom_call.1} parent=1 // pred_check
      _
    $region7: #{tpu_custom_call.1} parent=1 // pred_check_branch
      %15 = sbr.rel (0) target = $region9
    $region8: #{tpu_custom_call.1} parent=1 // pred_region
      %s16 = sadd.s32 0, 0
      %s17 = sld [smem:[#allocation3 + %s16]]
      %p18 = scmp.lt.s32.totalorder %s17, 0
      %s19 = scalar_select %p18, %s17, 0
      %s20 = smul.addr %s19, 2
      %s21 = scalar_lea.vmem %s3, %s20
      %s22 = sadd.s32 0, 0
      %s23 = sld [smem:[#allocation3 + %s22]]
    $region9: #{tpu_custom_call.1} parent=1 // pred_fallthru
      _
    %s24 = sadd.s32 0, 0
    %s25 = sld [smem:[#allocation3 + %s24]]
    %p26 = scmp.lt.s32.totalorder %s25, 0
    %s27 = scalar_select %p26, %s25, 0
    %s28 = smul.addr %s27, 2
    %s29 = scalar_lea.vmem %s3, %s28
    %s30 = sadd.s32 0, 0
    %s31 = sld [smem:[#allocation3 + %s30]]
    %p32 = scmp.lt.s32.totalorder %s31, 0
    %s33 = scalar_select %p32, %s31, 0
    %s34 = smul.addr %s33, 2
    %s35 = scalar_lea.vmem %s3, %s34
    %s36 = sadd.s32 0, 0
    %s37 = sld [smem:[#allocation3 + %s36]]
    %p38 = scmp.eq.s32.totalorder 0, 0
    // Predicated region
    $region10: #{tpu_custom_call.1} parent=1 // pred_check
      %p39 = pneg %p38
    $region11: #{tpu_custom_call.1} parent=1 // pred_check_branch
      %41 = sbr.rel (%p39) target = $region13
    $region12: #{tpu_custom_call.1} parent=1 // pred_region
      %42 = vst [vmem:[#allocation5] sm:$0xff] 0.0
    $region13: #{tpu_custom_call.1} parent=1 // pred_fallthru
      _
    %s43 = sld [smem:[#allocation4]]
    %p44 = scmp.lt.s32.totalorder 0, %s43
    // Predicated region
    $region14: #{tpu_custom_call.1} parent=1 // pred_check
      %p45 = pneg %p44
    $region15: #{tpu_custom_call.1} parent=1 // pred_check_branch
      %47 = sbr.rel (%p45) target = $region17
    $region16: #{tpu_custom_call.1} parent=1 // pred_region
      %s48 = sadd.s32 0, 0
      %s49 = sld [smem:[#allocation3 + %s48]]
      %s50 = smul.u32 %s49, 128
      %v51 = vld [vmem:[%s2] sm:$0x1]
      %v52 = vld [vmem:[%s35] sm:$0xff]
      %v53 = vlaneseq
      %v54 = vand.u32 %v53, 127
      %v55 = vstv %s50
      %v56 = vadd.s32 %v54, %v55
      %vm57 = vcmp.lt.s32.totalorder %v56, 30
      %v58 = vsel %vm57, %v52, 0.0
      %v59 = vlaneseq
      %v60 = vshrl.u32 %v59, 7
      %v61 = vadd.s32 %v60, 8
      %v62 = vadd.s32 %v60, 16
      %v63 = vadd.s32 %v60, 24
      %v64 = vadd.s32 %v60, 32
      %v65 = vadd.s32 %v60, 40
      %v66 = vadd.s32 %v60, 48
      %v67 = vadd.s32 %v60, 56
      %v68 = vadd.s32 %v60, 64
      %v69 = vadd.s32 %v60, 72
      %v70 = vadd.s32 %v60, 80
      %v71 = vadd.s32 %v60, 88
      %v72 = vadd.s32 %v60, 96
      %v73 = vadd.s32 %v60, 104
      %v74 = vadd.s32 %v60, 112
      %v75 = vadd.s32 %v60, 120
      %v76 = vsub.s32 %v51, %v55
      %v77 = vlaneseq
      %v78 = vshrl.u32 %v77, 7
      %v79 = vsub.s32 0, %v78
      %v80 = vrot.slane %v76, %v79
      %vm81 = vcmp.eq.s32.totalorder %v60, %v80
      %vm82 = vcmp.eq.s32.totalorder %v61, %v80
      %vm83 = vcmp.eq.s32.totalorder %v62, %v80
      %vm84 = vcmp.eq.s32.totalorder %v63, %v80
      %vm85 = vcmp.eq.s32.totalorder %v64, %v80
      %vm86 = vcmp.eq.s32.totalorder %v65, %v80
      %vm87 = vcmp.eq.s32.totalorder %v66, %v80
      %vm88 = vcmp.eq.s32.totalorder %v67, %v80
      %vm89 = vcmp.eq.s32.totalorder %v68, %v80
      %vm90 = vcmp.eq.s32.totalorder %v69, %v80
      %vm91 = vcmp.eq.s32.totalorder %v70, %v80
      %vm92 = vcmp.eq.s32.totalorder %v71, %v80
      %vm93 = vcmp.eq.s32.totalorder %v72, %v80
      %vm94 = vcmp.eq.s32.totalorder %v73, %v80
      %vm95 = vcmp.eq.s32.totalorder %v74, %v80
      %vm96 = vcmp.eq.s32.totalorder %v75, %v80
      %v97 = vsel %vm81, 1, 0
      %v98 = vsel %vm82, 1, 0
      %v99 = vsel %vm83, 1, 0
      %v100 = vsel %vm84, 1, 0
      %v101 = vsel %vm85, 1, 0
      %v102 = vsel %vm86, 1, 0
      %v103 = vsel %vm87, 1, 0
      %v104 = vsel %vm88, 1, 0
      %v105 = vsel %vm89, 1, 0
      %v106 = vsel %vm90, 1, 0
      %v107 = vsel %vm91, 1, 0
      %v108 = vsel %vm92, 1, 0
      %v109 = vsel %vm93, 1, 0
      %v110 = vsel %vm94, 1, 0
      %v111 = vsel %vm95, 1, 0
      %v112 = vsel %vm96, 1, 0
      %v113 = vcvt.s32.f32 %v97
      %v114 = vcvt.s32.f32 %v98
      %v115 = vcvt.s32.f32 %v99
      %v116 = vcvt.s32.f32 %v100
      %v117 = vcvt.s32.f32 %v101
      %v118 = vcvt.s32.f32 %v102
      %v119 = vcvt.s32.f32 %v103
      %v120 = vcvt.s32.f32 %v104
      %v121 = vcvt.s32.f32 %v105
      %v122 = vcvt.s32.f32 %v106
      %v123 = vcvt.s32.f32 %v107
      %v124 = vcvt.s32.f32 %v108
      %v125 = vcvt.s32.f32 %v109
      %v126 = vcvt.s32.f32 %v110
      %v127 = vcvt.s32.f32 %v111
      %v128 = vcvt.s32.f32 %v112
      %v129 = vld [vmem:[#allocation5] sm:$0xff]
      %130 = vmatprep.subr.mxu0 0.0
      %v131 = vand.u32 %v128, 4294901760
      %132 = vmatpush1.msra.mxu0 %v131
      %133 = vmatprep.subr.mxu0 0.0
      %v134 = vand.u32 %v127, 4294901760
      %135 = vmatpush1.msra.mxu0 %v134
      %136 = vmatprep.subr.mxu0 0.0
      %v137 = vand.u32 %v126, 4294901760
      %138 = vmatpush1.msra.mxu0 %v137
      %139 = vmatprep.subr.mxu0 0.0
      %v140 = vand.u32 %v125, 4294901760
      %141 = vmatpush1.msra.mxu0 %v140
      %142 = vmatprep.subr.mxu0 0.0
      %v143 = vand.u32 %v124, 4294901760
      %144 = vmatpush1.msra.mxu0 %v143
      %145 = vmatprep.subr.mxu0 0.0
      %v146 = vand.u32 %v123, 4294901760
      %147 = vmatpush1.msra.mxu0 %v146
      %148 = vmatprep.subr.mxu0 0.0
      %v149 = vand.u32 %v122, 4294901760
      %150 = vmatpush1.msra.mxu0 %v149
      %151 = vmatprep.subr.mxu0 0.0
      %v152 = vand.u32 %v121, 4294901760
      %153 = vmatpush1.msra.mxu0 %v152
      %154 = vmatprep.subr.mxu0 0.0
      %v155 = vand.u32 %v120, 4294901760
      %156 = vmatpush1.msra.mxu0 %v155
      %157 = vmatprep.subr.mxu0 0.0
      %v158 = vand.u32 %v119, 4294901760
      %159 = vmatpush1.msra.mxu0 %v158
      %160 = vmatprep.subr.mxu0 0.0
      %v161 = vand.u32 %v118, 4294901760
      %162 = vmatpush1.msra.mxu0 %v161
      %163 = vmatprep.subr.mxu0 0.0
      %v164 = vand.u32 %v117, 4294901760
      %165 = vmatpush1.msra.mxu0 %v164
      %166 = vmatprep.subr.mxu0 0.0
      %v167 = vand.u32 %v116, 4294901760
      %168 = vmatpush1.msra.mxu0 %v167
      %169 = vmatprep.subr.mxu0 0.0
      %v170 = vand.u32 %v115, 4294901760
      %171 = vmatpush1.msra.mxu0 %v170
      %172 = vmatprep.subr.mxu0 0.0
      %v173 = vand.u32 %v114, 4294901760
      %174 = vmatpush1.msra.mxu0 %v173
      %175 = vmatprep.subr.mxu0 0.0
      %v176 = vand.u32 %v113, 4294901760
      %177 = vmatpush1.msra.mxu0 %v176
      %178 = vmatprep.subr.mxu0 0.0
      %179 = vmatpush2.msra.mxu0 0.0
      %180 = vmatprep.subr.mxu0 0.0
      %181 = vmatpush2.msra.mxu0 0.0
      %182 = vmatprep.subr.mxu0 0.0
      %183 = vmatpush2.msra.mxu0 0.0
      %184 = vmatprep.subr.mxu0 0.0
      %185 = vmatpush2.msra.mxu0 0.0
      %186 = vmatprep.subr.mxu0 0.0
      %187 = vmatpush2.msra.mxu0 0.0
      %188 = vmatprep.subr.mxu0 0.0
      %189 = vmatpush2.msra.mxu0 0.0
      %190 = vmatprep.subr.mxu0 0.0
      %191 = vmatpush2.msra.mxu0 0.0
      %192 = vmatprep.subr.mxu0 0.0
      %193 = vmatpush2.msra.mxu0 0.0
      %194 = vmatprep.subr.mxu0 0.0
      %195 = vmatpush2.msra.mxu0 0.0
      %196 = vmatprep.subr.mxu0 0.0
      %197 = vmatpush2.msra.mxu0 0.0
      %198 = vmatprep.subr.mxu0 0.0
      %199 = vmatpush2.msra.mxu0 0.0
      %200 = vmatprep.subr.mxu0 0.0
      %201 = vmatpush2.msra.mxu0 0.0
      %202 = vmatprep.subr.mxu0 0.0
      %203 = vmatpush2.msra.mxu0 0.0
      %204 = vmatprep.subr.mxu0 0.0
      %205 = vmatpush2.msra.mxu0 0.0
      %206 = vmatprep.subr.mxu0 0.0
      %207 = vmatpush2.msra.mxu0 0.0
      %208 = vmatprep.subr.mxu0 0.0
      %209 = vmatpush2.msra.mxu0 0.0
      %210 = vmatprep.mubr.f32.mxu0 0.0
      %v211 = vand.u32 %v58, 4294901760
      %v212 = vsub.f32 %v58, %v211
      %v213 = vand.u32 %v212, 4294901760
      %v214 = vsub.f32 %v212, %v213
      %v215 = vand.u32 %v214, 4294901760
      %216 = vmatmul.mubr.f32.gmra.mxu0 %v215
      %v217 = vpop.f32.mrf.mxu0
      %v218 = vadd.f32 0.0, %v217
      %v219 = vpop.f32.mrf.mxu0
      %220 = vdwg.mxu0
      %221 = vmatprep.subr.mxu0 0.0
      %v222 = vand.u32 %v128, 4294901760
      %v223 = vsub.f32 %v128, %v222
      %v224 = vand.u32 %v223, 4294901760
      %v225 = vsub.f32 %v223, %v224
      %v226 = vand.u32 %v225, 4294901760
      %227 = vmatpush1.msra.mxu0 %v226
      %228 = vmatprep.subr.mxu0 0.0
      %v229 = vand.u32 %v127, 4294901760
      %v230 = vsub.f32 %v127, %v229
      %v231 = vand.u32 %v230, 4294901760
      %v232 = vsub.f32 %v230, %v231
      %v233 = vand.u32 %v232, 4294901760
      %234 = vmatpush1.msra.mxu0 %v233
      %235 = vmatprep.subr.mxu0 0.0
      %v236 = vand.u32 %v126, 4294901760
      %v237 = vsub.f32 %v126, %v236
      %v238 = vand.u32 %v237, 4294901760
      %v239 = vsub.f32 %v237, %v238
      %v240 = vand.u32 %v239, 4294901760
      %241 = vmatpush1.msra.mxu0 %v240
      %242 = vmatprep.subr.mxu0 0.0
      %v243 = vand.u32 %v125, 4294901760
      %v244 = vsub.f32 %v125, %v243
      %v245 = vand.u32 %v244, 4294901760
      %v246 = vsub.f32 %v244, %v245
      %v247 = vand.u32 %v246, 4294901760
      %248 = vmatpush1.msra.mxu0 %v247
      %249 = vmatprep.subr.mxu0 0.0
      %v250 = vand.u32 %v124, 4294901760
      %v251 = vsub.f32 %v124, %v250
      %v252 = vand.u32 %v251, 4294901760
      %v253 = vsub.f32 %v251, %v252
      %v254 = vand.u32 %v253, 4294901760
      %255 = vmatpush1.msra.mxu0 %v254
      %256 = vmatprep.subr.mxu0 0.0
      %v257 = vand.u32 %v123, 4294901760
      %v258 = vsub.f32 %v123, %v257
      %v259 = vand.u32 %v258, 4294901760
      %v260 = vsub.f32 %v258, %v259
      %v261 = vand.u32 %v260, 4294901760
      %262 = vmatpush1.msra.mxu0 %v261
      %263 = vmatprep.subr.mxu0 0.0
      %v264 = vand.u32 %v122, 4294901760
      %v265 = vsub.f32 %v122, %v264
      %v266 = vand.u32 %v265, 4294901760
      %v267 = vsub.f32 %v265, %v266
      %v268 = vand.u32 %v267, 4294901760
      %269 = vmatpush1.msra.mxu0 %v268
      %270 = vmatprep.subr.mxu0 0.0
      %v271 = vand.u32 %v121, 4294901760
      %v272 = vsub.f32 %v121, %v271
      %v273 = vand.u32 %v272, 4294901760
      %v274 = vsub.f32 %v272, %v273
      %v275 = vand.u32 %v274, 4294901760
      %276 = vmatpush1.msra.mxu0 %v275
      %277 = vmatprep.subr.mxu0 0.0
      %v278 = vand.u32 %v120, 4294901760
      %v279 = vsub.f32 %v120, %v278
      %v280 = vand.u32 %v279, 4294901760
      %v281 = vsub.f32 %v279, %v280
      %v282 = vand.u32 %v281, 4294901760
      %283 = vmatpush1.msra.mxu0 %v282
      %284 = vmatprep.subr.mxu0 0.0
      %v285 = vand.u32 %v119, 4294901760
      %v286 = vsub.f32 %v119, %v285
      %v287 = vand.u32 %v286, 4294901760
      %v288 = vsub.f32 %v286, %v287
      %v289 = vand.u32 %v288, 4294901760
      %290 = vmatpush1.msra.mxu0 %v289
      %291 = vmatprep.subr.mxu0 0.0
      %v292 = vand.u32 %v118, 4294901760
      %v293 = vsub.f32 %v118, %v292
      %v294 = vand.u32 %v293, 4294901760
      %v295 = vsub.f32 %v293, %v294
      %v296 = vand.u32 %v295, 4294901760
      %297 = vmatpush1.msra.mxu0 %v296
      %298 = vmatprep.subr.mxu0 0.0
      %v299 = vand.u32 %v117, 4294901760
      %v300 = vsub.f32 %v117, %v299
      %v301 = vand.u32 %v300, 4294901760
      %v302 = vsub.f32 %v300, %v301
      %v303 = vand.u32 %v302, 4294901760
      %304 = vmatpush1.msra.mxu0 %v303
      %305 = vmatprep.subr.mxu0 0.0
      %v306 = vand.u32 %v116, 4294901760
      %v307 = vsub.f32 %v116, %v306
      %v308 = vand.u32 %v307, 4294901760
      %v309 = vsub.f32 %v307, %v308
      %v310 = vand.u32 %v309, 4294901760
      %311 = vmatpush1.msra.mxu0 %v310
      %312 = vmatprep.subr.mxu0 0.0
      %v313 = vand.u32 %v115, 4294901760
      %v314 = vsub.f32 %v115, %v313
      %v315 = vand.u32 %v314, 4294901760
      %v316 = vsub.f32 %v314, %v315
      %v317 = vand.u32 %v316, 4294901760
      %318 = vmatpush1.msra.mxu0 %v317
      %319 = vmatprep.subr.mxu0 0.0
      %v320 = vand.u32 %v114, 4294901760
      %v321 = vsub.f32 %v114, %v320
      %v322 = vand.u32 %v321, 4294901760
      %v323 = vsub.f32 %v321, %v322
      %v324 = vand.u32 %v323, 4294901760
      %325 = vmatpush1.msra.mxu0 %v324
      %326 = vmatprep.subr.mxu0 0.0
      %v327 = vand.u32 %v113, 4294901760
      %v328 = vsub.f32 %v113, %v327
      %v329 = vand.u32 %v328, 4294901760
      %v330 = vsub.f32 %v328, %v329
      %v331 = vand.u32 %v330, 4294901760
      %332 = vmatpush1.msra.mxu0 %v331
      %333 = vmatprep.subr.mxu0 0.0
      %334 = vmatpush2.msra.mxu0 0.0
      %335 = vmatprep.subr.mxu0 0.0
      %336 = vmatpush2.msra.mxu0 0.0
      %337 = vmatprep.subr.mxu0 0.0
      %338 = vmatpush2.msra.mxu0 0.0
      %339 = vmatprep.subr.mxu0 0.0
      %340 = vmatpush2.msra.mxu0 0.0
      %341 = vmatprep.subr.mxu0 0.0
      %342 = vmatpush2.msra.mxu0 0.0
      %343 = vmatprep.subr.mxu0 0.0
      %344 = vmatpush2.msra.mxu0 0.0
      %345 = vmatprep.subr.mxu0 0.0
      %346 = vmatpush2.msra.mxu0 0.0
      %347 = vmatprep.subr.mxu0 0.0
      %348 = vmatpush2.msra.mxu0 0.0
      %349 = vmatprep.subr.mxu0 0.0
      %350 = vmatpush2.msra.mxu0 0.0
      %351 = vmatprep.subr.mxu0 0.0
      %352 = vmatpush2.msra.mxu0 0.0
      %353 = vmatprep.subr.mxu0 0.0
      %354 = vmatpush2.msra.mxu0 0.0
      %355 = vmatprep.subr.mxu0 0.0
      %356 = vmatpush2.msra.mxu0 0.0
      %357 = vmatprep.subr.mxu0 0.0
      %358 = vmatpush2.msra.mxu0 0.0
      %359 = vmatprep.subr.mxu0 0.0
      %360 = vmatpush2.msra.mxu0 0.0
      %361 = vmatprep.subr.mxu0 0.0
      %362 = vmatpush2.msra.mxu0 0.0
      %363 = vmatprep.subr.mxu0 0.0
      %364 = vmatpush2.msra.mxu0 0.0
      %365 = vmatprep.mubr.f32.mxu0 0.0
      %v366 = vand.u32 %v58, 4294901760
      %367 = vmatmul.mubr.f32.gmra.mxu0 %v366
      %v368 = vpop.f32.mrf.mxu0
      %v369 = vadd.f32 %v218, %v368
      %v370 = vpop.f32.mrf.mxu0
      %371 = vdwg.mxu0
      %372 = vmatprep.subr.mxu0 0.0
      %v373 = vand.u32 %v128, 4294901760
      %v374 = vsub.f32 %v128, %v373
      %375 = vmatpush1.msra.mxu0 %v374
      %376 = vmatprep.subr.mxu0 0.0
      %v377 = vand.u32 %v127, 4294901760
      %v378 = vsub.f32 %v127, %v377
      %379 = vmatpush1.msra.mxu0 %v378
      %380 = vmatprep.subr.mxu0 0.0
      %v381 = vand.u32 %v126, 4294901760
      %v382 = vsub.f32 %v126, %v381
      %383 = vmatpush1.msra.mxu0 %v382
      %384 = vmatprep.subr.mxu0 0.0
      %v385 = vand.u32 %v125, 4294901760
      %v386 = vsub.f32 %v125, %v385
      %387 = vmatpush1.msra.mxu0 %v386
      %388 = vmatprep.subr.mxu0 0.0
      %v389 = vand.u32 %v124, 4294901760
      %v390 = vsub.f32 %v124, %v389
      %391 = vmatpush1.msra.mxu0 %v390
      %392 = vmatprep.subr.mxu0 0.0
      %v393 = vand.u32 %v123, 4294901760
      %v394 = vsub.f32 %v123, %v393
      %395 = vmatpush1.msra.mxu0 %v394
      %396 = vmatprep.subr.mxu0 0.0
      %v397 = vand.u32 %v122, 4294901760
      %v398 = vsub.f32 %v122, %v397
      %399 = vmatpush1.msra.mxu0 %v398
      %400 = vmatprep.subr.mxu0 0.0
      %v401 = vand.u32 %v121, 4294901760
      %v402 = vsub.f32 %v121, %v401
      %403 = vmatpush1.msra.mxu0 %v402
      %404 = vmatprep.subr.mxu0 0.0
      %v405 = vand.u32 %v120, 4294901760
      %v406 = vsub.f32 %v120, %v405
      %407 = vmatpush1.msra.mxu0 %v406
      %408 = vmatprep.subr.mxu0 0.0
      %v409 = vand.u32 %v119, 4294901760
      %v410 = vsub.f32 %v119, %v409
      %411 = vmatpush1.msra.mxu0 %v410
      %412 = vmatprep.subr.mxu0 0.0
      %v413 = vand.u32 %v118, 4294901760
      %v414 = vsub.f32 %v118, %v413
      %415 = vmatpush1.msra.mxu0 %v414
      %416 = vmatprep.subr.mxu0 0.0
      %v417 = vand.u32 %v117, 4294901760
      %v418 = vsub.f32 %v117, %v417
      %419 = vmatpush1.msra.mxu0 %v418
      %420 = vmatprep.subr.mxu0 0.0
      %v421 = vand.u32 %v116, 4294901760
      %v422 = vsub.f32 %v116, %v421
      %423 = vmatpush1.msra.mxu0 %v422
      %424 = vmatprep.subr.mxu0 0.0
      %v425 = vand.u32 %v115, 4294901760
      %v426 = vsub.f32 %v115, %v425
      %427 = vmatpush1.msra.mxu0 %v426
      %428 = vmatprep.subr.mxu0 0.0
      %v429 = vand.u32 %v114, 4294901760
      %v430 = vsub.f32 %v114, %v429
      %431 = vmatpush1.msra.mxu0 %v430
      %432 = vmatprep.subr.mxu0 0.0
      %v433 = vand.u32 %v113, 4294901760
      %v434 = vsub.f32 %v113, %v433
      %435 = vmatpush1.msra.mxu0 %v434
      %436 = vmatprep.subr.mxu0 0.0
      %437 = vmatpush2.msra.mxu0 0.0
      %438 = vmatprep.subr.mxu0 0.0
      %439 = vmatpush2.msra.mxu0 0.0
      %440 = vmatprep.subr.mxu0 0.0
      %441 = vmatpush2.msra.mxu0 0.0
      %442 = vmatprep.subr.mxu0 0.0
      %443 = vmatpush2.msra.mxu0 0.0
      %444 = vmatprep.subr.mxu0 0.0
      %445 = vmatpush2.msra.mxu0 0.0
      %446 = vmatprep.subr.mxu0 0.0
      %447 = vmatpush2.msra.mxu0 0.0
      %448 = vmatprep.subr.mxu0 0.0
      %449 = vmatpush2.msra.mxu0 0.0
      %450 = vmatprep.subr.mxu0 0.0
      %451 = vmatpush2.msra.mxu0 0.0
      %452 = vmatprep.subr.mxu0 0.0
      %453 = vmatpush2.msra.mxu0 0.0
      %454 = vmatprep.subr.mxu0 0.0
      %455 = vmatpush2.msra.mxu0 0.0
      %456 = vmatprep.subr.mxu0 0.0
      %457 = vmatpush2.msra.mxu0 0.0
      %458 = vmatprep.subr.mxu0 0.0
      %459 = vmatpush2.msra.mxu0 0.0
      %460 = vmatprep.subr.mxu0 0.0
      %461 = vmatpush2.msra.mxu0 0.0
      %462 = vmatprep.subr.mxu0 0.0
      %463 = vmatpush2.msra.mxu0 0.0
      %464 = vmatprep.subr.mxu0 0.0
      %465 = vmatpush2.msra.mxu0 0.0
      %466 = vmatprep.subr.mxu0 0.0
      %467 = vmatpush2.msra.mxu0 0.0
      %468 = vmatprep.mubr.f32.mxu0 0.0
      %v469 = vand.u32 %v58, 4294901760
      %v470 = vsub.f32 %v58, %v469
      %471 = vmatmul.mubr.f32.gmra.mxu0 %v470
      %v472 = vpop.f32.mrf.mxu0
      %v473 = vadd.f32 %v369, %v472
      %v474 = vpop.f32.mrf.mxu0
      %475 = vdwg.mxu0
      %476 = vmatprep.subr.mxu0 0.0
      %v477 = vand.u32 %v128, 4294901760
      %478 = vmatpush1.msra.mxu0 %v477
      %479 = vmatprep.subr.mxu0 0.0
      %v480 = vand.u32 %v127, 4294901760
      %481 = vmatpush1.msra.mxu0 %v480
      %482 = vmatprep.subr.mxu0 0.0
      %v483 = vand.u32 %v126, 4294901760
      %484 = vmatpush1.msra.mxu0 %v483
      %485 = vmatprep.subr.mxu0 0.0
      %v486 = vand.u32 %v125, 4294901760
      %487 = vmatpush1.msra.mxu0 %v486
      %488 = vmatprep.subr.mxu0 0.0
      %v489 = vand.u32 %v124, 4294901760
      %490 = vmatpush1.msra.mxu0 %v489
      %491 = vmatprep.subr.mxu0 0.0
      %v492 = vand.u32 %v123, 4294901760
      %493 = vmatpush1.msra.mxu0 %v492
      %494 = vmatprep.subr.mxu0 0.0
      %v495 = vand.u32 %v122, 4294901760
      %496 = vmatpush1.msra.mxu0 %v495
      %497 = vmatprep.subr.mxu0 0.0
      %v498 = vand.u32 %v121, 4294901760
      %499 = vmatpush1.msra.mxu0 %v498
      %500 = vmatprep.subr.mxu0 0.0
      %v501 = vand.u32 %v120, 4294901760
      %502 = vmatpush1.msra.mxu0 %v501
      %503 = vmatprep.subr.mxu0 0.0
      %v504 = vand.u32 %v119, 4294901760
      %505 = vmatpush1.msra.mxu0 %v504
      %506 = vmatprep.subr.mxu0 0.0
      %v507 = vand.u32 %v118, 4294901760
      %508 = vmatpush1.msra.mxu0 %v507
      %509 = vmatprep.subr.mxu0 0.0
      %v510 = vand.u32 %v117, 4294901760
      %511 = vmatpush1.msra.mxu0 %v510
      %512 = vmatprep.subr.mxu0 0.0
      %v513 = vand.u32 %v116, 4294901760
      %514 = vmatpush1.msra.mxu0 %v513
      %515 = vmatprep.subr.mxu0 0.0
      %v516 = vand.u32 %v115, 4294901760
      %517 = vmatpush1.msra.mxu0 %v516
      %518 = vmatprep.subr.mxu0 0.0
      %v519 = vand.u32 %v114, 4294901760
      %520 = vmatpush1.msra.mxu0 %v519
      %521 = vmatprep.subr.mxu0 0.0
      %v522 = vand.u32 %v113, 4294901760
      %523 = vmatpush1.msra.mxu0 %v522
      %524 = vmatprep.subr.mxu0 0.0
      %525 = vmatpush2.msra.mxu0 0.0
      %526 = vmatprep.subr.mxu0 0.0
      %527 = vmatpush2.msra.mxu0 0.0
      %528 = vmatprep.subr.mxu0 0.0
      %529 = vmatpush2.msra.mxu0 0.0
      %530 = vmatprep.subr.mxu0 0.0
      %531 = vmatpush2.msra.mxu0 0.0
      %532 = vmatprep.subr.mxu0 0.0
      %533 = vmatpush2.msra.mxu0 0.0
      %534 = vmatprep.subr.mxu0 0.0
      %535 = vmatpush2.msra.mxu0 0.0
      %536 = vmatprep.subr.mxu0 0.0
      %537 = vmatpush2.msra.mxu0 0.0
      %538 = vmatprep.subr.mxu0 0.0
      %539 = vmatpush2.msra.mxu0 0.0
      %540 = vmatprep.subr.mxu0 0.0
      %541 = vmatpush2.msra.mxu0 0.0
      %542 = vmatprep.subr.mxu0 0.0
      %543 = vmatpush2.msra.mxu0 0.0
      %544 = vmatprep.subr.mxu0 0.0
      %545 = vmatpush2.msra.mxu0 0.0
      %546 = vmatprep.subr.mxu0 0.0
      %547 = vmatpush2.msra.mxu0 0.0
      %548 = vmatprep.subr.mxu0 0.0
      %549 = vmatpush2.msra.mxu0 0.0
      %550 = vmatprep.subr.mxu0 0.0
      %551 = vmatpush2.msra.mxu0 0.0
      %552 = vmatprep.subr.mxu0 0.0
      %553 = vmatpush2.msra.mxu0 0.0
      %554 = vmatprep.subr.mxu0 0.0
      %555 = vmatpush2.msra.mxu0 0.0
      %556 = vmatprep.mubr.f32.mxu0 0.0
      %v557 = vand.u32 %v58, 4294901760
      %v558 = vsub.f32 %v58, %v557
      %v559 = vand.u32 %v558, 4294901760
      %560 = vmatmul.mubr.f32.gmra.mxu0 %v559
      %v561 = vpop.f32.mrf.mxu0
      %v562 = vadd.f32 %v473, %v561
      %v563 = vpop.f32.mrf.mxu0
      %564 = vdwg.mxu0
      %565 = vmatprep.subr.mxu0 0.0
      %v566 = vand.u32 %v128, 4294901760
      %v567 = vsub.f32 %v128, %v566
      %v568 = vand.u32 %v567, 4294901760
      %569 = vmatpush1.msra.mxu0 %v568
      %570 = vmatprep.subr.mxu0 0.0
      %v571 = vand.u32 %v127, 4294901760
      %v572 = vsub.f32 %v127, %v571
      %v573 = vand.u32 %v572, 4294901760
      %574 = vmatpush1.msra.mxu0 %v573
      %575 = vmatprep.subr.mxu0 0.0
      %v576 = vand.u32 %v126, 4294901760
      %v577 = vsub.f32 %v126, %v576
      %v578 = vand.u32 %v577, 4294901760
      %579 = vmatpush1.msra.mxu0 %v578
      %580 = vmatprep.subr.mxu0 0.0
      %v581 = vand.u32 %v125, 4294901760
      %v582 = vsub.f32 %v125, %v581
      %v583 = vand.u32 %v582, 4294901760
      %584 = vmatpush1.msra.mxu0 %v583
      %585 = vmatprep.subr.mxu0 0.0
      %v586 = vand.u32 %v124, 4294901760
      %v587 = vsub.f32 %v124, %v586
      %v588 = vand.u32 %v587, 4294901760
      %589 = vmatpush1.msra.mxu0 %v588
      %590 = vmatprep.subr.mxu0 0.0
      %v591 = vand.u32 %v123, 4294901760
      %v592 = vsub.f32 %v123, %v591
      %v593 = vand.u32 %v592, 4294901760
      %594 = vmatpush1.msra.mxu0 %v593
      %595 = vmatprep.subr.mxu0 0.0
      %v596 = vand.u32 %v122, 4294901760
      %v597 = vsub.f32 %v122, %v596
      %v598 = vand.u32 %v597, 4294901760
      %599 = vmatpush1.msra.mxu0 %v598
      %600 = vmatprep.subr.mxu0 0.0
      %v601 = vand.u32 %v121, 4294901760
      %v602 = vsub.f32 %v121, %v601
      %v603 = vand.u32 %v602, 4294901760
      %604 = vmatpush1.msra.mxu0 %v603
      %605 = vmatprep.subr.mxu0 0.0
      %v606 = vand.u32 %v120, 4294901760
      %v607 = vsub.f32 %v120, %v606
      %v608 = vand.u32 %v607, 4294901760
      %609 = vmatpush1.msra.mxu0 %v608
      %610 = vmatprep.subr.mxu0 0.0
      %v611 = vand.u32 %v119, 4294901760
      %v612 = vsub.f32 %v119, %v611
      %v613 = vand.u32 %v612, 4294901760
      %614 = vmatpush1.msra.mxu0 %v613
      %615 = vmatprep.subr.mxu0 0.0
      %v616 = vand.u32 %v118, 4294901760
      %v617 = vsub.f32 %v118, %v616
      %v618 = vand.u32 %v617, 4294901760
      %619 = vmatpush1.msra.mxu0 %v618
      %620 = vmatprep.subr.mxu0 0.0
      %v621 = vand.u32 %v117, 4294901760
      %v622 = vsub.f32 %v117, %v621
      %v623 = vand.u32 %v622, 4294901760
      %624 = vmatpush1.msra.mxu0 %v623
      %625 = vmatprep.subr.mxu0 0.0
      %v626 = vand.u32 %v116, 4294901760
      %v627 = vsub.f32 %v116, %v626
      %v628 = vand.u32 %v627, 4294901760
      %629 = vmatpush1.msra.mxu0 %v628
      %630 = vmatprep.subr.mxu0 0.0
      %v631 = vand.u32 %v115, 4294901760
      %v632 = vsub.f32 %v115, %v631
      %v633 = vand.u32 %v632, 4294901760
      %634 = vmatpush1.msra.mxu0 %v633
      %635 = vmatprep.subr.mxu0 0.0
      %v636 = vand.u32 %v114, 4294901760
      %v637 = vsub.f32 %v114, %v636
      %v638 = vand.u32 %v637, 4294901760
      %639 = vmatpush1.msra.mxu0 %v638
      %640 = vmatprep.subr.mxu0 0.0
      %v641 = vand.u32 %v113, 4294901760
      %v642 = vsub.f32 %v113, %v641
      %v643 = vand.u32 %v642, 4294901760
      %644 = vmatpush1.msra.mxu0 %v643
      %645 = vmatprep.subr.mxu0 0.0
      %646 = vmatpush2.msra.mxu0 0.0
      %647 = vmatprep.subr.mxu0 0.0
      %648 = vmatpush2.msra.mxu0 0.0
      %649 = vmatprep.subr.mxu0 0.0
      %650 = vmatpush2.msra.mxu0 0.0
      %651 = vmatprep.subr.mxu0 0.0
      %652 = vmatpush2.msra.mxu0 0.0
      %653 = vmatprep.subr.mxu0 0.0
      %654 = vmatpush2.msra.mxu0 0.0
      %655 = vmatprep.subr.mxu0 0.0
      %656 = vmatpush2.msra.mxu0 0.0
      %657 = vmatprep.subr.mxu0 0.0
      %658 = vmatpush2.msra.mxu0 0.0
      %659 = vmatprep.subr.mxu0 0.0
      %660 = vmatpush2.msra.mxu0 0.0
      %661 = vmatprep.subr.mxu0 0.0
      %662 = vmatpush2.msra.mxu0 0.0
      %663 = vmatprep.subr.mxu0 0.0
      %664 = vmatpush2.msra.mxu0 0.0
      %665 = vmatprep.subr.mxu0 0.0
      %666 = vmatpush2.msra.mxu0 0.0
      %667 = vmatprep.subr.mxu0 0.0
      %668 = vmatpush2.msra.mxu0 0.0
      %669 = vmatprep.subr.mxu0 0.0
      %670 = vmatpush2.msra.mxu0 0.0
      %671 = vmatprep.subr.mxu0 0.0
      %672 = vmatpush2.msra.mxu0 0.0
      %673 = vmatprep.subr.mxu0 0.0
      %674 = vmatpush2.msra.mxu0 0.0
      %675 = vmatprep.subr.mxu0 0.0
      %676 = vmatpush2.msra.mxu0 0.0
      %677 = vmatprep.mubr.f32.mxu0 0.0
      %v678 = vand.u32 %v58, 4294901760
      %679 = vmatmul.mubr.f32.gmra.mxu0 %v678
      %v680 = vpop.f32.mrf.mxu0
      %v681 = vadd.f32 %v562, %v680
      %v682 = vpop.f32.mrf.mxu0
      %683 = vdwg.mxu0
      %684 = vmatprep.subr.mxu0 0.0
      %v685 = vand.u32 %v128, 4294901760
      %686 = vmatpush1.msra.mxu0 %v685
      %687 = vmatprep.subr.mxu0 0.0
      %v688 = vand.u32 %v127, 4294901760
      %689 = vmatpush1.msra.mxu0 %v688
      %690 = vmatprep.subr.mxu0 0.0
      %v691 = vand.u32 %v126, 4294901760
      %692 = vmatpush1.msra.mxu0 %v691
      %693 = vmatprep.subr.mxu0 0.0
      %v694 = vand.u32 %v125, 4294901760
      %695 = vmatpush1.msra.mxu0 %v694
      %696 = vmatprep.subr.mxu0 0.0
      %v697 = vand.u32 %v124, 4294901760
      %698 = vmatpush1.msra.mxu0 %v697
      %699 = vmatprep.subr.mxu0 0.0
      %v700 = vand.u32 %v123, 4294901760
      %701 = vmatpush1.msra.mxu0 %v700
      %702 = vmatprep.subr.mxu0 0.0
      %v703 = vand.u32 %v122, 4294901760
      %704 = vmatpush1.msra.mxu0 %v703
      %705 = vmatprep.subr.mxu0 0.0
      %v706 = vand.u32 %v121, 4294901760
      %707 = vmatpush1.msra.mxu0 %v706
      %708 = vmatprep.subr.mxu0 0.0
      %v709 = vand.u32 %v120, 4294901760
      %710 = vmatpush1.msra.mxu0 %v709
      %711 = vmatprep.subr.mxu0 0.0
      %v712 = vand.u32 %v119, 4294901760
      %713 = vmatpush1.msra.mxu0 %v712
      %714 = vmatprep.subr.mxu0 0.0
      %v715 = vand.u32 %v118, 4294901760
      %716 = vmatpush1.msra.mxu0 %v715
      %717 = vmatprep.subr.mxu0 0.0
      %v718 = vand.u32 %v117, 4294901760
      %719 = vmatpush1.msra.mxu0 %v718
      %720 = vmatprep.subr.mxu0 0.0
      %v721 = vand.u32 %v116, 4294901760
      %722 = vmatpush1.msra.mxu0 %v721
      %723 = vmatprep.subr.mxu0 0.0
      %v724 = vand.u32 %v115, 4294901760
      %725 = vmatpush1.msra.mxu0 %v724
      %726 = vmatprep.subr.mxu0 0.0
      %v727 = vand.u32 %v114, 4294901760
      %728 = vmatpush1.msra.mxu0 %v727
      %729 = vmatprep.subr.mxu0 0.0
      %v730 = vand.u32 %v113, 4294901760
      %731 = vmatpush1.msra.mxu0 %v730
      %732 = vmatprep.subr.mxu0 0.0
      %733 = vmatpush2.msra.mxu0 0.0
      %734 = vmatprep.subr.mxu0 0.0
      %735 = vmatpush2.msra.mxu0 0.0
      %736 = vmatprep.subr.mxu0 0.0
      %737 = vmatpush2.msra.mxu0 0.0
      %738 = vmatprep.subr.mxu0 0.0
      %739 = vmatpush2.msra.mxu0 0.0
      %740 = vmatprep.subr.mxu0 0.0
      %741 = vmatpush2.msra.mxu0 0.0
      %742 = vmatprep.subr.mxu0 0.0
      %743 = vmatpush2.msra.mxu0 0.0
      %744 = vmatprep.subr.mxu0 0.0
      %745 = vmatpush2.msra.mxu0 0.0
      %746 = vmatprep.subr.mxu0 0.0
      %747 = vmatpush2.msra.mxu0 0.0
      %748 = vmatprep.subr.mxu0 0.0
      %749 = vmatpush2.msra.mxu0 0.0
      %750 = vmatprep.subr.mxu0 0.0
      %751 = vmatpush2.msra.mxu0 0.0
      %752 = vmatprep.subr.mxu0 0.0
      %753 = vmatpush2.msra.mxu0 0.0
      %754 = vmatprep.subr.mxu0 0.0
      %755 = vmatpush2.msra.mxu0 0.0
      %756 = vmatprep.subr.mxu0 0.0
      %757 = vmatpush2.msra.mxu0 0.0
      %758 = vmatprep.subr.mxu0 0.0
      %759 = vmatpush2.msra.mxu0 0.0
      %760 = vmatprep.subr.mxu0 0.0
      %761 = vmatpush2.msra.mxu0 0.0
      %762 = vmatprep.subr.mxu0 0.0
      %763 = vmatpush2.msra.mxu0 0.0
      %764 = vmatprep.mubr.f32.mxu0 0.0
      %v765 = vand.u32 %v58, 4294901760
      %766 = vmatmul.mubr.f32.gmra.mxu0 %v765
      %v767 = vpop.f32.mrf.mxu0
      %v768 = vadd.f32 %v681, %v767
      %v769 = vpop.f32.mrf.mxu0
      %770 = vdwg.mxu0
      %v771 = vadd.f32 %v129, %v768
      %772 = vst [vmem:[#allocation5] sm:$0xff] %v771
    $region17: #{tpu_custom_call.1} parent=1 // pred_fallthru
      _
    // Predicated region
    $region18: #{tpu_custom_call.1} parent=1 // pred_check
      _
    $region19: #{tpu_custom_call.1} parent=1 // pred_check_branch
      %774 = sbr.rel (0) target = $region21
    $region20: #{tpu_custom_call.1} parent=1 // pred_region
      %s776 = ssub.s32 128, 32
      %777 = vsyncadd [#allocation6], %s776
      %s778 = sshll.u32 [#allocation5], 4
      %s779 = int_to_ptr.vmem [resolvable:$true] %s778
      %784 = dma.vmem_to_hbm [thread:$0]  %s779, 32, %s4, [#allocation6], 32, 32, 2
    $region21: #{tpu_custom_call.1} parent=1 // pred_fallthru
      _
    // Predicated region
    $region22: #{tpu_custom_call.1} parent=1 // pred_check
      _
    $region23: #{tpu_custom_call.1} parent=1 // pred_check_branch
      %786 = sbr.rel (0) target = $region25
    $region24: #{tpu_custom_call.1} parent=1 // pred_region
      %787 = dma.done [#allocation6], 128
    $region25: #{tpu_custom_call.1} parent=1 // pred_fallthru
      _
    %788 = vsyncpa [#allocation6], 1

</llo_original>
